<compile_context>
chip_gen: v7x
topology: tpu7x:2x2x1
jax: 0.10.0
libtpu: 0.0.40
codegen_flags: <defaults>
</compile_context>

<pallas_src>
import jax
import jax.numpy as jnp
from jax.experimental import pallas as pl
from jax.experimental.pallas import tpu as pltpu

HIDDEN1 = 16
HIDDEN2 = 32


def _critic_kernel(x_ref, w1_ref, b1_ref, w2_ref, b2_ref, w3c_ref, b3_ref, out_ref):
    # x tile: (S, TB) with the batch on the lane axis (matches torch x.float()).
    x = x_ref[...].astype(jnp.float32)
    s = x.shape[0]

    # ---- Layer 1: Linear(state_dim, 16) + ReLU, on the VPU -----------------
    # K = state_dim is tiny (~4), so an MXU matmul would do <2% useful work per
    # push.  Do it as S broadcast-FMAs instead: (16,1) * (1,TB) -> (16,TB).
    w1 = w1_ref[...]                                   # (16, S)
    acc = w1[:, 0:1] * x[0:1, :]
    for k in range(1, s):                              # S is static at trace time
        acc = acc + w1[:, k:k + 1] * x[k:k + 1, :]
    h1 = jnp.maximum(acc + b1_ref[...], 0.0)           # (16, TB)

    # ---- Layer 2: Linear(16, 32) + ReLU, on the MXU ------------------------
    h2 = jnp.dot(w2_ref[...], h1, preferred_element_type=jnp.float32) + b2_ref[...]
    h2 = jnp.maximum(h2, 0.0)                          # (32, TB)

    # ---- Layer 3: Linear(32, 1), VPU multiply + XLU sublane reduce ---------
    # M = 1 is a terrible MXU shape; multiply by the (32,1) weight column and
    # reduce over the 32 sublanes instead.  Output tile (1, TB) is lane-dense.
    out_ref[...] = (
        jnp.sum(w3c_ref[...] * h2, axis=0, keepdims=True) + b3_ref[...]
    )


def critic_net_forward(x, params, *, block_b=32768):
    """x: (B, state_dim).  params: w1 (16,S), b1 (16,1), w2 (32,16), b2 (32,1),
    w3 (1,32), b3 (1,1) -- torch's native (out_features, in_features) layout."""
    B, S = x.shape
    w1, b1 = params["w1"], params["b1"]
    w2, b2 = params["w2"], params["b2"]
    w3, b3 = params["w3"], params["b3"]
    # (1,32) -> (32,1): same row-major data, avoids an in-kernel transpose.
    w3c = w3.reshape(HIDDEN2, 1)

    # ---- batch tiling -------------------------------------------------------
    b_pad128 = 128 * pl.cdiv(B, 128)                 # batch rounded up to lanes
    tb = max(128, 128 * (int(block_b) // 128))       # requested tile (lane-aligned)
    tb = min(tb, b_pad128)                           # never larger than the batch
    if b_pad128 >= 256:
        # Ensure >= 2 grid steps so "parallel" can shard across v7x's two TCs.
        tb = min(tb, 128 * pl.cdiv(b_pad128, 2 * 128))
    b_pad = tb * pl.cdiv(B, tb)
    grid = (b_pad // tb,)

    # Single pad op on the transposed / cast input (pad columns are zero; the
    # padded lanes compute finite relu(bias) chains and are sliced off below).
    xt = jnp.pad(x.T.astype(jnp.float32), ((0, 0), (0, b_pad - B)))

    # Parameters: full-array blocks with a constant block index -> loaded once,
    # resident in VMEM for the whole grid.
    resident = lambda a: pl.BlockSpec(a.shape, lambda i: (0, 0))

    param_bytes = sum(int(a.size) * a.dtype.itemsize for a in (w1, b1, w2, b2, w3c, b3))
    cost = pl.CostEstimate(
        flops=2 * b_pad * (S * HIDDEN1 + HIDDEN1 * HIDDEN2 + HIDDEN2 * 1),
        transcendentals=0,
        bytes_accessed=4 * b_pad * (S + 1) + param_bytes,
    )

    out_t = pl.pallas_call(
        _critic_kernel,
        out_shape=jax.ShapeDtypeStruct((1, b_pad), jnp.float32),
        grid=grid,
        in_specs=[
            pl.BlockSpec((S, tb), lambda i: (0, i)),     # x: batch-tiled on lanes
            resident(w1), resident(b1),
            resident(w2), resident(b2),
            resident(w3c), resident(b3),
        ],
        out_specs=pl.BlockSpec((1, tb), lambda i: (0, i)),
        compiler_params=pltpu.CompilerParams(
            dimension_semantics=("parallel",),
            vmem_limit_bytes=32 * 1024 * 1024,           # big tiles safe on v5e/v7x
        ),
        cost_estimate=cost,
    )(xt, w1, b1, w2, b2, w3c, b3)

    # (1, B_pad) -> (B, 1) to match the PyTorch module's output shape.
    return out_t[0, :B].reshape(B, 1)


def init_params(key, state_dim):
    """Deterministic init mimicking torch Linear default U(-1/sqrt(in), 1/sqrt(in)).
    Weights kept in torch's (out_features, in_features) layout; biases as (out, 1).
    Everything is created in f32 once, outside the hot path."""
    ks = jax.random.split(key, 6)

    def linear(kw, kb, fan_in, fan_out):
        bound = 1.0 / float(fan_in) ** 0.5
        w = jax.random.uniform(kw, (fan_out, fan_in), jnp.float32, -bound, bound)
        b = jax.random.uniform(kb, (fan_out, 1), jnp.float32, -bound, bound)
        return w, b

    w1, b1 = linear(ks[0], ks[1], state_dim, HIDDEN1)
    w2, b2 = linear(ks[2], ks[3], HIDDEN1, HIDDEN2)
    w3, b3 = linear(ks[4], ks[5], HIDDEN2, 1)
    return {"w1": w1, "b1": b1, "w2": w2, "b2": b2, "w3": w3, "b3": b3}


def _reference(x, p):
    x = x.astype(jnp.float32)
    h1 = jnp.maximum(x @ p["w1"].T + p["b1"][:, 0], 0.0)
    h2 = jnp.maximum(h1 @ p["w2"].T + p["b2"][:, 0], 0.0)
    return h2 @ p["w3"].T + p["b3"][:, 0]


if __name__ == "__main__":
    key = jax.random.PRNGKey(0)
    k_x, k_x2, k_p = jax.random.split(key, 3)

    state_dim = 4
    params = init_params(k_p, state_dim)

    # Small check (single tile, padded batch).
    batch = 2
    x = jax.random.normal(k_x, (batch, state_dim), jnp.float32)
    out = jax.block_until_ready(critic_net_forward(x, params))
    ref = _reference(x, params)
    assert out.shape == (batch, 1), out.shape
    assert jnp.allclose(out, ref, atol=1e-5, rtol=1e-5), (out, ref)

    # Default tile: batch=300 exercises the ">=2 grid steps" cap (grid of 2).
    batch2 = 300
    x2 = jax.random.normal(k_x2, (batch2, state_dim), jnp.float32)
    out2 = jax.block_until_ready(critic_net_forward(x2, params))
    ref2 = _reference(x2, params)
    assert out2.shape == (batch2, 1), out2.shape
    assert jnp.allclose(out2, ref2, atol=1e-5, rtol=1e-5)

    # Small explicit tile: several grid steps, batch not a multiple of the tile.
    out3 = jax.block_until_ready(critic_net_forward(x2, params, block_b=128))
    assert out3.shape == (batch2, 1), out3.shape
    assert jnp.allclose(out3, ref2, atol=1e-5, rtol=1e-5)

    print("KERNEL_OK")
</pallas_src>

<mosaic_0001>
module attributes {stable_mosaic.version = 11 : i64} {
  func.func @_critic_kernel(%arg0: i32, %arg1: memref<4x128xf32, #tpu.memory_space<vmem>>, %arg2: memref<16x4xf32, #tpu.memory_space<vmem>>, %arg3: memref<16x1xf32, #tpu.memory_space<vmem>>, %arg4: memref<32x16xf32, #tpu.memory_space<vmem>>, %arg5: memref<32x1xf32, #tpu.memory_space<vmem>>, %arg6: memref<32x1xf32, #tpu.memory_space<vmem>>, %arg7: memref<1x1xf32, #tpu.memory_space<vmem>>, %arg8: memref<1x128xf32, #tpu.memory_space<vmem>>) attributes {dimension_semantics = [#tpu.dimension_semantics<parallel>], iteration_bounds = array<i64: 1>, scalar_prefetch = 0 : i64, scratch_operands = 0 : i64, tpu.core_type = #tpu.core_type<tc>, window_params = [{transform_indices = @transform_0, window_bounds = array<i64: 4, 128>}, {pipeline_mode = #tpu.pipeline_mode<synchronous>, transform_indices = @transform_1, window_bounds = array<i64: 16, 4>}, {pipeline_mode = #tpu.pipeline_mode<synchronous>, transform_indices = @transform_2, window_bounds = array<i64: 16, 1>}, {pipeline_mode = #tpu.pipeline_mode<synchronous>, transform_indices = @transform_3, window_bounds = array<i64: 32, 16>}, {pipeline_mode = #tpu.pipeline_mode<synchronous>, transform_indices = @transform_4, window_bounds = array<i64: 32, 1>}, {pipeline_mode = #tpu.pipeline_mode<synchronous>, transform_indices = @transform_5, window_bounds = array<i64: 32, 1>}, {pipeline_mode = #tpu.pipeline_mode<synchronous>, transform_indices = @transform_6, window_bounds = array<i64: 1, 1>}, {transform_indices = @transform_7, window_bounds = array<i64: 1, 128>}]} {
    %c0 = arith.constant 0 : index
    %c0_0 = arith.constant 0 : index
    %0 = vector.load %arg1[%c0, %c0_0] : memref<4x128xf32, #tpu.memory_space<vmem>>, vector<4x128xf32>
    %c0_1 = arith.constant 0 : index
    %c0_2 = arith.constant 0 : index
    %1 = vector.load %arg2[%c0_1, %c0_2] : memref<16x4xf32, #tpu.memory_space<vmem>>, vector<16x4xf32>
    %2 = vector.extract_strided_slice %1 {offsets = [0, 0], sizes = [16, 1], strides = [1, 1]} : vector<16x4xf32> to vector<16x1xf32>
    %3 = vector.extract_strided_slice %0 {offsets = [0, 0], sizes = [1, 128], strides = [1, 1]} : vector<4x128xf32> to vector<1x128xf32>
    %4 = vector.broadcast %2 : vector<16x1xf32> to vector<16x128xf32>
    %5 = vector.broadcast %3 : vector<1x128xf32> to vector<16x128xf32>
    %6 = arith.mulf %4, %5 : vector<16x128xf32>
    %7 = vector.extract_strided_slice %1 {offsets = [0, 1], sizes = [16, 1], strides = [1, 1]} : vector<16x4xf32> to vector<16x1xf32>
    %8 = vector.extract_strided_slice %0 {offsets = [1, 0], sizes = [1, 128], strides = [1, 1]} : vector<4x128xf32> to vector<1x128xf32>
    %9 = vector.broadcast %7 : vector<16x1xf32> to vector<16x128xf32>
    %10 = vector.broadcast %8 : vector<1x128xf32> to vector<16x128xf32>
    %11 = arith.mulf %9, %10 : vector<16x128xf32>
    %12 = arith.addf %6, %11 : vector<16x128xf32>
    %13 = vector.extract_strided_slice %1 {offsets = [0, 2], sizes = [16, 1], strides = [1, 1]} : vector<16x4xf32> to vector<16x1xf32>
    %14 = vector.extract_strided_slice %0 {offsets = [2, 0], sizes = [1, 128], strides = [1, 1]} : vector<4x128xf32> to vector<1x128xf32>
    %15 = vector.broadcast %13 : vector<16x1xf32> to vector<16x128xf32>
    %16 = vector.broadcast %14 : vector<1x128xf32> to vector<16x128xf32>
    %17 = arith.mulf %15, %16 : vector<16x128xf32>
    %18 = arith.addf %12, %17 : vector<16x128xf32>
    %19 = vector.extract_strided_slice %1 {offsets = [0, 3], sizes = [16, 1], strides = [1, 1]} : vector<16x4xf32> to vector<16x1xf32>
    %20 = vector.extract_strided_slice %0 {offsets = [3, 0], sizes = [1, 128], strides = [1, 1]} : vector<4x128xf32> to vector<1x128xf32>
    %21 = vector.broadcast %19 : vector<16x1xf32> to vector<16x128xf32>
    %22 = vector.broadcast %20 : vector<1x128xf32> to vector<16x128xf32>
    %23 = arith.mulf %21, %22 : vector<16x128xf32>
    %24 = arith.addf %18, %23 : vector<16x128xf32>
    %c0_3 = arith.constant 0 : index
    %c0_4 = arith.constant 0 : index
    %25 = vector.load %arg3[%c0_3, %c0_4] : memref<16x1xf32, #tpu.memory_space<vmem>>, vector<16x1xf32>
    %26 = vector.broadcast %25 : vector<16x1xf32> to vector<16x128xf32>
    %27 = arith.addf %24, %26 : vector<16x128xf32>
    %cst = arith.constant 0.000000e+00 : f32
    %28 = vector.broadcast %cst : f32 to vector<16x128xf32>
    %29 = arith.maximumf %27, %28 : vector<16x128xf32>
    %c0_5 = arith.constant 0 : index
    %c0_6 = arith.constant 0 : index
    %30 = vector.load %arg4[%c0_5, %c0_6] : memref<32x16xf32, #tpu.memory_space<vmem>>, vector<32x16xf32>
    %cst_7 = arith.constant dense<0.000000e+00> : vector<32x128xf32>
    %31 = tpu.matmul %30, %29, %cst_7 {dimension_numbers = #tpu.dot_dimension_numbers<[1], [0], [0], [1], [0, 0, 1, 1], [], []>} : vector<32x16xf32>, vector<16x128xf32>, vector<32x128xf32> -> vector<32x128xf32>
    %c0_8 = arith.constant 0 : index
    %c0_9 = arith.constant 0 : index
    %32 = vector.load %arg5[%c0_8, %c0_9] : memref<32x1xf32, #tpu.memory_space<vmem>>, vector<32x1xf32>
    %33 = vector.broadcast %32 : vector<32x1xf32> to vector<32x128xf32>
    %34 = arith.addf %31, %33 : vector<32x128xf32>
    %cst_10 = arith.constant 0.000000e+00 : f32
    %35 = vector.broadcast %cst_10 : f32 to vector<32x128xf32>
    %36 = arith.maximumf %34, %35 : vector<32x128xf32>
    %c0_11 = arith.constant 0 : index
    %c0_12 = arith.constant 0 : index
    %37 = vector.load %arg6[%c0_11, %c0_12] : memref<32x1xf32, #tpu.memory_space<vmem>>, vector<32x1xf32>
    %38 = vector.broadcast %37 : vector<32x1xf32> to vector<32x128xf32>
    %39 = arith.mulf %38, %36 : vector<32x128xf32>
    %cst_13 = arith.constant dense<0.000000e+00> : vector<128xf32>
    %40 = vector.multi_reduction <add>, %39, %cst_13 [0] : vector<32x128xf32> to vector<128xf32>
    %41 = vector.shape_cast %40 : vector<128xf32> to vector<1x128xf32>
    %c0_14 = arith.constant 0 : index
    %c0_15 = arith.constant 0 : index
    %42 = vector.load %arg7[%c0_14, %c0_15] : memref<1x1xf32, #tpu.memory_space<vmem>>, vector<1x1xf32>
    %43 = vector.broadcast %42 : vector<1x1xf32> to vector<1x128xf32>
    %44 = arith.addf %41, %43 : vector<1x128xf32>
    %c0_16 = arith.constant 0 : index
    %c0_17 = arith.constant 0 : index
    %45 = vector.load %arg8[%c0_16, %c0_17] : memref<1x128xf32, #tpu.memory_space<vmem>>, vector<1x128xf32>
    tpu.vector_store %arg8[%c0_16, %c0_17], %44 {strides = array<i32>} : memref<1x128xf32, #tpu.memory_space<vmem>>, vector<1x128xf32>,
    return
  }
  func.func @transform_0(%arg0: i32) -> (i32, i32) {
    %c0_i32 = arith.constant 0 : i32
    %c0_i32_0 = arith.constant 0 : i32
    return %c0_i32, %arg0 : i32, i32
  }
  func.func @transform_1(%arg0: i32) -> (i32, i32) {
    %c0_i32 = arith.constant 0 : i32
    %c0_i32_0 = arith.constant 0 : i32
    %c0_i32_1 = arith.constant 0 : i32
    return %c0_i32, %c0_i32_0 : i32, i32
  }
  func.func @transform_2(%arg0: i32) -> (i32, i32) {
    %c0_i32 = arith.constant 0 : i32
    %c0_i32_0 = arith.constant 0 : i32
    %c0_i32_1 = arith.constant 0 : i32
    return %c0_i32, %c0_i32_0 : i32, i32
  }
  func.func @transform_3(%arg0: i32) -> (i32, i32) {
    %c0_i32 = arith.constant 0 : i32
    %c0_i32_0 = arith.constant 0 : i32
    %c0_i32_1 = arith.constant 0 : i32
    return %c0_i32, %c0_i32_0 : i32, i32
  }
  func.func @transform_4(%arg0: i32) -> (i32, i32) {
    %c0_i32 = arith.constant 0 : i32
    %c0_i32_0 = arith.constant 0 : i32
    %c0_i32_1 = arith.constant 0 : i32
    return %c0_i32, %c0_i32_0 : i32, i32
  }
  func.func @transform_5(%arg0: i32) -> (i32, i32) {
    %c0_i32 = arith.constant 0 : i32
    %c0_i32_0 = arith.constant 0 : i32
    %c0_i32_1 = arith.constant 0 : i32
    return %c0_i32, %c0_i32_0 : i32, i32
  }
  func.func @transform_6(%arg0: i32) -> (i32, i32) {
    %c0_i32 = arith.constant 0 : i32
    %c0_i32_0 = arith.constant 0 : i32
    %c0_i32_1 = arith.constant 0 : i32
    return %c0_i32, %c0_i32_0 : i32, i32
  }
  func.func @transform_7(%arg0: i32) -> (i32, i32) {
    %c0_i32 = arith.constant 0 : i32
    %c0_i32_0 = arith.constant 0 : i32
    return %c0_i32, %arg0 : i32, i32
  }
}

</mosaic_0001>

<llo_original>
// kernel: tpu_custom_call.1
$region0: #{tpu_custom_call.1}
  #allocation0 [shape = 'u32[]', space=smem, size = 0x4, offset = 0x4, fixed_abs, tag = 'smem constant byte address 0x4 - core index']
  #allocation1 [shape = 'u32[144,128]{1,0:T(1,128)}', space=vmem, size = 0x12000, scoped, tag = 'internal scratch']
  #allocation2 [shape = 'f32[1,1]{1,0:T(1,128)S(1)}', space=vmem, size = 0x200, scoped, tag = 'scoped memory for tpu_custom_call.1']
  %s0 = inlined_call_operand.vmem [shape: f32[4,128], index: 0, kind: input, shape index: {}]
  %s1 = inlined_call_operand.vmem [shape: f32[16,4], index: 1, kind: input, shape index: {}]
  %s2 = inlined_call_operand.vmem [shape: f32[16,1], index: 2, kind: input, shape index: {}]
  %s3 = inlined_call_operand.vmem [shape: f32[32,16], index: 3, kind: input, shape index: {}]
  %s4 = inlined_call_operand.vmem [shape: f32[32,1], index: 4, kind: input, shape index: {}]
  %s5 = inlined_call_operand.vmem [shape: f32[32,1], index: 5, kind: input, shape index: {}]
  %s6 = inlined_call_operand.<no memory space> [shape: f32[1,1], index: 6, kind: input, shape index: {}]
  %s7 = inlined_call_operand.hbm [shape: f32[1,128], index: 7, kind: output, shape index: {}]
  %s8 = sld [smem:[#allocation0]]
  $region38: #{tpu_custom_call.1} parent=0
    _
  %s10 = ssub.s32 1, %s8
  %s11 = scalar_select 0, %s10, %s8
  %v12 = vstv %s6
  %13 = vst [vmem:[#allocation2] sm:$0x1] %v12
  $region1: #{tpu_custom_call.1} parent=0
    #allocation3 [shape = 'u8[512]{0}', space=vmem, size = 0x400, scoped, tag = 'output window, operand 0, single buffered']
    #allocation4 [shape = 's32[1]{0}', space=sflag, size = 0x4, scoped, tag = 'scoped memory for tpu_custom_call.1']
    %14 = vsyncpa [#allocation4], 0
    // Predicated region
    $region2: #{tpu_custom_call.1} parent=1 // pred_check
      _
    $region3: #{tpu_custom_call.1} parent=1 // pred_check_branch
      %16 = sbr.rel (0) target = $region5
    $region4: #{tpu_custom_call.1} parent=1 // pred_region
      _
    $region5: #{tpu_custom_call.1} parent=1 // pred_fallthru
      _
    // Predicated region
    $region6: #{tpu_custom_call.1} parent=1 // pred_check
      _
    $region7: #{tpu_custom_call.1} parent=1 // pred_check_branch
      %18 = sbr.rel (0) target = $region9
    $region8: #{tpu_custom_call.1} parent=1 // pred_region
      _
    $region9: #{tpu_custom_call.1} parent=1 // pred_fallthru
      _
    // Predicated region
    $region10: #{tpu_custom_call.1} parent=1 // pred_check
      _
    $region11: #{tpu_custom_call.1} parent=1 // pred_check_branch
      %20 = sbr.rel (0) target = $region13
    $region12: #{tpu_custom_call.1} parent=1 // pred_region
      _
    $region13: #{tpu_custom_call.1} parent=1 // pred_fallthru
      _
    // Predicated region
    $region14: #{tpu_custom_call.1} parent=1 // pred_check
      _
    $region15: #{tpu_custom_call.1} parent=1 // pred_check_branch
      %22 = sbr.rel (0) target = $region17
    $region16: #{tpu_custom_call.1} parent=1 // pred_region
      _
    $region17: #{tpu_custom_call.1} parent=1 // pred_fallthru
      _
    // Predicated region
    $region18: #{tpu_custom_call.1} parent=1 // pred_check
      _
    $region19: #{tpu_custom_call.1} parent=1 // pred_check_branch
      %24 = sbr.rel (0) target = $region21
    $region20: #{tpu_custom_call.1} parent=1 // pred_region
      _
    $region21: #{tpu_custom_call.1} parent=1 // pred_fallthru
      _
    // Predicated region
    $region22: #{tpu_custom_call.1} parent=1 // pred_check
      _
    $region23: #{tpu_custom_call.1} parent=1 // pred_check_branch
      %26 = sbr.rel (0) target = $region25
    $region24: #{tpu_custom_call.1} parent=1 // pred_region
      _
    $region25: #{tpu_custom_call.1} parent=1 // pred_fallthru
      _
    // Predicated region
    $region26: #{tpu_custom_call.1} parent=1 // pred_check
      _
    $region27: #{tpu_custom_call.1} parent=1 // pred_check_branch
      %28 = sbr.rel (0) target = $region29
    $region28: #{tpu_custom_call.1} parent=1 // pred_region
      _
    $region29: #{tpu_custom_call.1} parent=1 // pred_fallthru
      _
    %v29 = vld [vmem:[%s0] sm:$0xf]
    %v30 = vld [vmem:[%s1] sm:$0xff]
    %v31 = vld [vmem:[%s1 + $0x8] sm:$0xff]
    %33 = vset.pattern.permute.xlu0 0
    %34 = vperm.xlu0 %33, %v30
    %v35 = vpop.permute.xlu0 %34
    %38 = vset.pattern.permute.xlu0 0
    %39 = vperm.xlu0 %38, %v31
    %v40 = vpop.permute.xlu0 %39
    %v42 = vlaneseq
    %v43 = vshrl.u32 %v42, 7
    %v44 = vsub.s32 0, %v43
    %v45 = vrot.slane %v29, %v44
    %v46 = vmul.f32 %v35, %v45
    %v47 = vmul.f32 %v40, %v45
    %48 = vset.pattern.permute.xlu0 1
    %49 = vperm.xlu0 %48, %v30
    %v50 = vpop.permute.xlu0 %49
    %52 = vset.pattern.permute.xlu0 1
    %53 = vperm.xlu0 %52, %v31
    %v54 = vpop.permute.xlu0 %53
    %v56 = vlaneseq
    %v57 = vshrl.u32 %v56, 7
    %v58 = vsub.s32 1, %v57
    %v59 = vrot.slane %v29, %v58
    %v60 = vmul.f32 %v50, %v59
    %v61 = vmul.f32 %v54, %v59
    %v62 = vadd.f32 %v46, %v60
    %v63 = vadd.f32 %v47, %v61
    %64 = vset.pattern.permute.xlu0 2
    %65 = vperm.xlu0 %64, %v30
    %v66 = vpop.permute.xlu0 %65
    %68 = vset.pattern.permute.xlu0 2
    %69 = vperm.xlu0 %68, %v31
    %v70 = vpop.permute.xlu0 %69
    %v72 = vlaneseq
    %v73 = vshrl.u32 %v72, 7
    %v74 = vsub.s32 2, %v73
    %v75 = vrot.slane %v29, %v74
    %v76 = vmul.f32 %v66, %v75
    %v77 = vmul.f32 %v70, %v75
    %v78 = vadd.f32 %v62, %v76
    %v79 = vadd.f32 %v63, %v77
    %80 = vset.pattern.permute.xlu0 3
    %81 = vperm.xlu0 %80, %v30
    %v82 = vpop.permute.xlu0 %81
    %84 = vset.pattern.permute.xlu0 3
    %85 = vperm.xlu0 %84, %v31
    %v86 = vpop.permute.xlu0 %85
    %v88 = vlaneseq
    %v89 = vshrl.u32 %v88, 7
    %v90 = vsub.s32 3, %v89
    %v91 = vrot.slane %v29, %v90
    %v92 = vmul.f32 %v82, %v91
    %v93 = vmul.f32 %v86, %v91
    %v94 = vadd.f32 %v78, %v92
    %v95 = vadd.f32 %v79, %v93
    %v96 = vld [vmem:[%s2] sm:$0xff]
    %v97 = vld [vmem:[%s2 + $0x8] sm:$0xff]
    %99 = vset.pattern.permute.xlu0 0
    %100 = vperm.xlu0 %99, %v96
    %v101 = vpop.permute.xlu0 %100
    %104 = vset.pattern.permute.xlu0 0
    %105 = vperm.xlu0 %104, %v97
    %v106 = vpop.permute.xlu0 %105
    %v108 = vadd.f32 %v94, %v101
    %v109 = vadd.f32 %v95, %v106
    %v110 = vmax.f32 %v108, 0.0
    %v111 = vmax.f32 %v109, 0.0
    %v112 = vld [vmem:[%s3] sm:$0xff]
    %v113 = vld [vmem:[%s3 + $0x8] sm:$0xff]
    %v114 = vld [vmem:[%s3 + $0x10] sm:$0xff]
    %v115 = vld [vmem:[%s3 + $0x18] sm:$0xff]
    %v116 = vld [vmem:[%s4] sm:$0xff]
    %v117 = vld [vmem:[%s4 + $0x8] sm:$0xff]
    %v118 = vld [vmem:[%s4 + $0x10] sm:$0xff]
    %v119 = vld [vmem:[%s4 + $0x18] sm:$0xff]
    %121 = vset.pattern.permute.xlu0 0
    %122 = vperm.xlu0 %121, %v116
    %v123 = vpop.permute.xlu0 %122
    %126 = vset.pattern.permute.xlu0 0
    %127 = vperm.xlu0 %126, %v117
    %v128 = vpop.permute.xlu0 %127
    %131 = vset.pattern.permute.xlu0 0
    %132 = vperm.xlu0 %131, %v118
    %v133 = vpop.permute.xlu0 %132
    %136 = vset.pattern.permute.xlu0 0
    %137 = vperm.xlu0 %136, %v119
    %v138 = vpop.permute.xlu0 %137
    %vm140 = vcmask 130048
    %v142 = vsel %vm140, %v112, 0
    %v145 = vsel %vm140, %v113, 0
    %v148 = vsel %vm140, %v114, 0
    %v151 = vsel %vm140, %v115, 0
    %153 = vmatprep.subr.mxu0 0.0
    %154 = vmatpush1.msra.mxu0 %v110
    %155 = vmatprep.subr.mxu0 0.0
    %156 = vmatpush1.msra.mxu0 %v111
    %157 = vmatprep.subr.mxu0 0.0
    %158 = vmatpush1.msra.mxu0 0.0
    %159 = vmatprep.subr.mxu0 0.0
    %160 = vmatpush1.msra.mxu0 0.0
    %161 = vmatprep.subr.mxu0 0.0
    %162 = vmatpush1.msra.mxu0 0.0
    %163 = vmatprep.subr.mxu0 0.0
    %164 = vmatpush1.msra.mxu0 0.0
    %165 = vmatprep.subr.mxu0 0.0
    %166 = vmatpush1.msra.mxu0 0.0
    %167 = vmatprep.subr.mxu0 0.0
    %168 = vmatpush1.msra.mxu0 0.0
    %169 = vmatprep.subr.mxu0 0.0
    %170 = vmatpush1.msra.mxu0 0.0
    %171 = vmatprep.subr.mxu0 0.0
    %172 = vmatpush1.msra.mxu0 0.0
    %173 = vmatprep.subr.mxu0 0.0
    %174 = vmatpush1.msra.mxu0 0.0
    %175 = vmatprep.subr.mxu0 0.0
    %176 = vmatpush1.msra.mxu0 0.0
    %177 = vmatprep.subr.mxu0 0.0
    %178 = vmatpush1.msra.mxu0 0.0
    %179 = vmatprep.subr.mxu0 0.0
    %180 = vmatpush1.msra.mxu0 0.0
    %181 = vmatprep.subr.mxu0 0.0
    %182 = vmatpush1.msra.mxu0 0.0
    %183 = vmatprep.subr.mxu0 0.0
    %184 = vmatpush1.msra.mxu0 0.0
    %185 = vmatprep.subr.mxu0 0.0
    %186 = vmatpush1.msra.mxu0 0.0
    %187 = vmatprep.subr.mxu0 0.0
    %188 = vmatpush1.msra.mxu0 0.0
    %189 = vmatprep.subr.mxu0 0.0
    %190 = vmatpush1.msra.mxu0 0.0
    %191 = vmatprep.subr.mxu0 0.0
    %192 = vmatpush1.msra.mxu0 0.0
    %193 = vmatprep.subr.mxu0 0.0
    %194 = vmatpush1.msra.mxu0 0.0
    %195 = vmatprep.subr.mxu0 0.0
    %196 = vmatpush1.msra.mxu0 0.0
    %197 = vmatprep.subr.mxu0 0.0
    %198 = vmatpush1.msra.mxu0 0.0
    %199 = vmatprep.subr.mxu0 0.0
    %200 = vmatpush1.msra.mxu0 0.0
    %201 = vmatprep.subr.mxu0 0.0
    %202 = vmatpush1.msra.mxu0 0.0
    %203 = vmatprep.subr.mxu0 0.0
    %204 = vmatpush1.msra.mxu0 0.0
    %205 = vmatprep.subr.mxu0 0.0
    %206 = vmatpush1.msra.mxu0 0.0
    %207 = vmatprep.subr.mxu0 0.0
    %208 = vmatpush1.msra.mxu0 0.0
    %209 = vmatprep.subr.mxu0 0.0
    %210 = vmatpush1.msra.mxu0 0.0
    %211 = vmatprep.subr.mxu0 0.0
    %212 = vmatpush1.msra.mxu0 0.0
    %213 = vmatprep.subr.mxu0 0.0
    %214 = vmatpush1.msra.mxu0 0.0
    %215 = vmatprep.subr.mxu0 0.0
    %216 = vmatpush1.msra.mxu0 0.0
    %217 = vmatprep.mubr.f32.mxu0 0.0
    %218 = vmatmul.mubr.f32.gmra.mrb[0].mxu0 %v142
    %v219 = vpop.f32.mrb[0].mxu0
    %v220 = vadd.f32 %v123, %v219
    %v221 = vpop.f32.mrb[0].mxu0
    %222 = vmatprep.mubr.f32.mxu0 0.0
    %223 = vmatmul.mubr.f32.gmra.mrb[0].mxu0 %v145
    %v224 = vpop.f32.mrb[0].mxu0
    %v225 = vadd.f32 %v128, %v224
    %v226 = vpop.f32.mrb[0].mxu0
    %227 = vmatprep.mubr.f32.mxu0 0.0
    %228 = vmatmul.mubr.f32.gmra.mrb[0].mxu0 %v148
    %v229 = vpop.f32.mrb[0].mxu0
    %v230 = vadd.f32 %v133, %v229
    %v231 = vpop.f32.mrb[0].mxu0
    %232 = vmatprep.mubr.f32.mxu0 0.0
    %233 = vmatmul.mubr.f32.gmra.mrb[0].mxu0 %v151
    %v234 = vpop.f32.mrb[0].mxu0
    %v235 = vadd.f32 %v138, %v234
    %v236 = vpop.f32.mrb[0].mxu0
    %237 = vdwg.mxu0
    %v238 = vmax.f32 %v220, 0.0
    %v239 = vmax.f32 %v225, 0.0
    %v240 = vmax.f32 %v230, 0.0
    %v241 = vmax.f32 %v235, 0.0
    %v242 = vld [vmem:[%s5] sm:$0xff]
    %v243 = vld [vmem:[%s5 + $0x8] sm:$0xff]
    %v244 = vld [vmem:[%s5 + $0x10] sm:$0xff]
    %v245 = vld [vmem:[%s5 + $0x18] sm:$0xff]
    %247 = vset.pattern.permute.xlu0 0
    %248 = vperm.xlu0 %247, %v242
    %v249 = vpop.permute.xlu0 %248
    %252 = vset.pattern.permute.xlu0 0
    %253 = vperm.xlu0 %252, %v243
    %v254 = vpop.permute.xlu0 %253
    %257 = vset.pattern.permute.xlu0 0
    %258 = vperm.xlu0 %257, %v244
    %v259 = vpop.permute.xlu0 %258
    %262 = vset.pattern.permute.xlu0 0
    %263 = vperm.xlu0 %262, %v245
    %v264 = vpop.permute.xlu0 %263
    %v266 = vmul.f32 %v249, %v238
    %v267 = vmul.f32 %v254, %v239
    %v268 = vmul.f32 %v259, %v240
    %v269 = vmul.f32 %v264, %v241
    %v270 = vadd.f32 %v266, %v267
    %v271 = vadd.f32 %v270, %v268
    %v272 = vadd.f32 %v271, %v269
    %v273 = vrot.slane %v272, 4
    %v274 = vadd.f32 %v272, %v273
    %v275 = vrot.slane %v274, 2
    %v276 = vadd.f32 %v274, %v275
    %v277 = vrot.slane %v276, 1
    %v278 = vadd.f32 %v276, %v277
    %v279 = vld [vmem:[#allocation2] sm:$0x1]
    %281 = vset.pattern.permute.xlu0 0
    %282 = vperm.xlu0 %281, %v279
    %v283 = vpop.permute.xlu0 %282
    %v285 = vlaneseq
    %v286 = vshrl.u32 %v285, 7
    %v287 = vsub.s32 0, %v286
    %v288 = vrot.slane %v283, %v287
    %v289 = vadd.f32 %v278, %v288
    %290 = vst [vmem:[#allocation3] sm:$0x1] %v289
    // Predicated region
    $region30: #{tpu_custom_call.1} parent=1 // pred_check
      _
    $region31: #{tpu_custom_call.1} parent=1 // pred_check_branch
      %292 = sbr.rel (0) target = $region33
    $region32: #{tpu_custom_call.1} parent=1 // pred_region
      %s294 = ssub.s32 16, 16
      %295 = vsyncadd [#allocation4], %s294
      %s297 = sshll.u32 [#allocation3], 4
      %s298 = int_to_ptr.vmem [resolvable:$true] %s297
      %300 = dma.vmem_to_hbm [thread:$0]  %s298, 16, %s7, [#allocation4]
    $region33: #{tpu_custom_call.1} parent=1 // pred_fallthru
      _
    // Predicated region
    $region34: #{tpu_custom_call.1} parent=1 // pred_check
      _
    $region35: #{tpu_custom_call.1} parent=1 // pred_check_branch
      %302 = sbr.rel (0) target = $region37
    $region36: #{tpu_custom_call.1} parent=1 // pred_region
      %303 = dma.done [#allocation4], 16
    $region37: #{tpu_custom_call.1} parent=1 // pred_fallthru
      _
    %304 = vsyncpa [#allocation4], 1

</llo_original>
